<compile_context>
chip_gen: v7x
topology: tpu7x:2x2x1
jax: 0.10.0
libtpu: 0.0.40
codegen_flags: <defaults>
</compile_context>

<pallas_src>
import functools

import numpy as np
import jax
import jax.numpy as jnp
from jax import lax
from jax.experimental import pallas as pl
from jax.experimental.pallas import tpu as pltpu


# ----------------------------------------------------------------------------
# Mask construction (glue, numpy)
# ----------------------------------------------------------------------------
def build_masked_conv_mask(channels, params, autoregressive_order="raster_cwh",
                           mask_type="A", k=3):
    """Mask for the OIHW weight of the masked conv, out_channels = channels*params."""
    cout, cin = channels * params, channels
    yc, xc = k // 2, k // 2
    mask = np.ones((cout, cin, k, k), np.float32)
    # spatial part: nothing below the centre row, nothing right of centre in centre row
    mask[:, :, yc + 1:, :] = 0.0
    mask[:, :, yc, xc + 1:] = 0.0
    if autoregressive_order == "raster_cwh":
        # TODO(synk): centre-tap channel grouping assumed interleaved (o % channels),
        # matching ElementwiseParams2d 'interleaved' mode; verify vs survae MaskedConv2d.
        for o in range(cout):
            grp = o % channels
            for i in range(cin):
                allowed = (i < grp) if mask_type == "A" else (i <= grp)
                mask[o, i, yc, xc] = 1.0 if allowed else 0.0
    elif autoregressive_order == "raster_wh":
        if mask_type == "A":
            mask[:, :, yc, xc] = 0.0
    else:
        raise ValueError(autoregressive_order)
    return mask


# ----------------------------------------------------------------------------
# Pallas kernel: one fused, lane-dense MXU matmul per pixel tile
# ----------------------------------------------------------------------------
def _fused_matmul_kernel(w_ref, f_ref, o_ref):
    # w_ref: (Cout_pad, K_pad) bf16  fused weight (conv taps ++ ctx ++ bias column,
    #        pre-scaled by 0.1, rows permuted to (c, p) order) -- resident in VMEM
    # f_ref: (K_pad, TM)       bf16  im2col(x) ++ ctx ++ ones row; pixel axis lane-dense
    # o_ref: (Cout_pad, TM)    f32   only Cout meaningful sublanes -> tiny writeback
    o_ref[...] = jnp.dot(w_ref[...], f_ref[...],
                         preferred_element_type=jnp.float32)


def _round_up(x, m):
    return (x + m - 1) // m * m


# ----------------------------------------------------------------------------
# Wrapper (NCHW in / (B, C, H, W, P) out — exactly as the PyTorch module)
# ----------------------------------------------------------------------------
@functools.partial(jax.jit, static_argnames=("channels", "num_params"))
def condnet_forward(x, context, w_conv_masked, b_conv, w_ctx, b_ctx,
                    *, channels, num_params):
    B, C, H, W = x.shape
    Cctx = context.shape[1]
    P = num_params
    Cout = channels * num_params

    M = B * H * W
    K = 9 * C + Cctx + 1
    K_pad = _round_up(K, 16)        # bf16 sublane packing (one bf16 vreg = [16,128])
    Cout_pad = _round_up(Cout, 8)   # output sublane alignment

    # Pixel axis is the 128-lane axis.  Use >= 2 grid steps so v7x's two
    # TensorCores both get work under dimension_semantics=("parallel",); cap TM
    # so per-step VMEM (double-buffered bf16 feats + f32 out + resident weight,
    # ~(4*K_pad + 8*Cout_pad) bytes per pixel column) stays well below v7x's
    # 64 MiB physical / 32 MiB default-scoped VMEM limit for any input size.
    TM_CAP = 8192
    M_pad = _round_up(M, 128)
    n_steps = max(2, pl.cdiv(M_pad, TM_CAP)) if M_pad >= 256 else 1
    TM = _round_up(pl.cdiv(M_pad, n_steps), 128)
    M_pad = n_steps * TM

    # ---- glue: build featsT (K, M) directly pixel-minor (NCHW is channel-major) ---
    x_pad = jnp.pad(x, ((0, 0), (0, 0), (1, 1), (1, 1)))        # (B, C, H+2, W+2)
    x_cb = jnp.transpose(x_pad, (1, 0, 2, 3))                    # (C, B, H+2, W+2)
    taps = [x_cb[:, :, ky:ky + H, kx:kx + W].reshape(C, M)
            for ky in range(3) for kx in range(3)]                # 9 x (C, M)
    ctx_cm = jnp.transpose(context, (1, 0, 2, 3)).reshape(Cctx, M)
    featsT = jnp.concatenate(taps + [ctx_cm, jnp.ones((1, M), x.dtype)], axis=0)
    featsT_p = jnp.pad(featsT.astype(jnp.bfloat16),
                       ((0, K_pad - K), (0, M_pad - M)))          # (K_pad, M_pad)

    # ---- glue: fold conv taps + 1x1 ctx + biases + 0.1 scale into one (Cout,K) ----
    # feature index f = (ky*3 + kx)*C + c  ->  column of w_conv_masked[o, c, ky, kx]
    w_taps = jnp.transpose(w_conv_masked, (0, 2, 3, 1)).reshape(Cout, 9 * C)
    w_ctx2d = w_ctx[:, :, 0, 0]                                   # (Cout, Cctx)
    bias_col = (b_conv + b_ctx).reshape(Cout, 1)
    w_all = 0.1 * jnp.concatenate([w_taps, w_ctx2d, bias_col], axis=1)   # (Cout, K)
    # ElementwiseParams2d (interleaved): old row o = p*C + c  ->  new row j = c*P + p
    w_all = w_all.reshape(P, channels, K).transpose(1, 0, 2).reshape(Cout, K)
    w_p = jnp.pad(w_all.astype(jnp.bfloat16),
                  ((0, Cout_pad - Cout), (0, K_pad - K)))          # (Cout_pad, K_pad)

    out = pl.pallas_call(
        _fused_matmul_kernel,
        out_shape=jax.ShapeDtypeStruct((Cout_pad, M_pad), jnp.float32),
        grid_spec=pltpu.PrefetchScalarGridSpec(
            num_scalar_prefetch=0,
            grid=(n_steps,),
            in_specs=[
                pl.BlockSpec((Cout_pad, K_pad), lambda i: (0, 0)),  # weight resident
                pl.BlockSpec((K_pad, TM), lambda i: (0, i)),
            ],
            out_specs=pl.BlockSpec((Cout_pad, TM), lambda i: (0, i)),
        ),
        compiler_params=pltpu.CompilerParams(
            dimension_semantics=("parallel",)),
        cost_estimate=pl.CostEstimate(
            flops=2 * M_pad * K_pad * Cout_pad,
            transcendentals=0,
            bytes_accessed=(K_pad * M_pad * 2 + Cout_pad * K_pad * 2
                            + Cout_pad * M_pad * 4)),
    )(w_p, featsT_p)

    # ---- glue: strip padding; rows already in (c, p) order ------------------------
    h = out[:Cout, :M].reshape(channels, P, B, H, W)
    return jnp.transpose(h, (2, 0, 3, 4, 1))                      # (B, C, H, W, P)


# ----------------------------------------------------------------------------
# Pure-JAX f32 reference (for correctness check)
# ----------------------------------------------------------------------------
def condnet_reference(x, context, w_conv_masked, b_conv, w_ctx, b_ctx,
                      *, channels, num_params):
    dn = ("NCHW", "OIHW", "NCHW")
    h1 = lax.conv_general_dilated(x, w_conv_masked, (1, 1), "SAME",
                                  dimension_numbers=dn) + b_conv[None, :, None, None]
    h2 = lax.conv_general_dilated(context, w_ctx, (1, 1), "SAME",
                                  dimension_numbers=dn) + b_ctx[None, :, None, None]
    h = h1 + h2
    B, CP, H, W = h.shape
    h = h.reshape(B, num_params, channels, H, W)
    h = jnp.transpose(h, (0, 2, 3, 4, 1))  # (B, C, H, W, P) -- 'interleaved' mode
    return 0.1 * h


# ----------------------------------------------------------------------------
# Main
# ----------------------------------------------------------------------------
if __name__ == "__main__":
    B, C, Cctx, P, H, W = 2, 4, 3, 2, 16, 16
    Cout = C * P

    key = jax.random.PRNGKey(0)
    kx, kc, k1, k2, k3, k4 = jax.random.split(key, 6)

    x = jax.random.normal(kx, (B, C, H, W), jnp.float32)
    context = jax.random.normal(kc, (B, Cctx, H, W), jnp.float32)

    # deterministic synthetic weights (shapes match the module's __init__)
    w_conv = 0.1 * jax.random.normal(k1, (Cout, C, 3, 3), jnp.float32)
    b_conv = 0.1 * jax.random.normal(k2, (Cout,), jnp.float32)
    w_ctx = 0.1 * jax.random.normal(k3, (Cout, Cctx, 1, 1), jnp.float32)
    b_ctx = 0.1 * jax.random.normal(k4, (Cout,), jnp.float32)

    # MaskedConv2d mask (autoregressive_order='raster_cwh', mask_type='A')
    mask = jnp.asarray(build_masked_conv_mask(C, P, "raster_cwh", "A"))
    w_conv_masked = w_conv * mask

    out = condnet_forward(x, context, w_conv_masked, b_conv, w_ctx, b_ctx,
                          channels=C, num_params=P)
    out = jax.block_until_ready(out)

    ref = condnet_reference(x, context, w_conv_masked, b_conv, w_ctx, b_ctx,
                            channels=C, num_params=P)

    assert out.shape == (B, C, H, W, P), out.shape
    # bf16 MXU operands vs f32 reference -> loosened tolerances
    np.testing.assert_allclose(np.asarray(out), np.asarray(ref),
                               rtol=5e-2, atol=5e-3)
    print("KERNEL_OK")
</pallas_src>

<mosaic_0001>
module attributes {stable_mosaic.version = 11 : i64} {
  func.func @_fused_matmul_kernel(%arg0: i32, %arg1: memref<8x48xbf16, #tpu.memory_space<vmem>>, %arg2: memref<48x256xbf16, #tpu.memory_space<vmem>>, %arg3: memref<8x256xf32, #tpu.memory_space<vmem>>) attributes {dimension_semantics = [#tpu.dimension_semantics<parallel>], iteration_bounds = array<i64: 2>, scalar_prefetch = 0 : i64, scratch_operands = 0 : i64, tpu.core_type = #tpu.core_type<tc>, window_params = [{pipeline_mode = #tpu.pipeline_mode<synchronous>, transform_indices = @transform_0, window_bounds = array<i64: 8, 48>}, {transform_indices = @transform_1, window_bounds = array<i64: 48, 256>}, {transform_indices = @transform_2, window_bounds = array<i64: 8, 256>}]} {
    %c0 = arith.constant 0 : index
    %c0_0 = arith.constant 0 : index
    %0 = vector.load %arg1[%c0, %c0_0] : memref<8x48xbf16, #tpu.memory_space<vmem>>, vector<8x48xbf16>
    %c0_1 = arith.constant 0 : index
    %c0_2 = arith.constant 0 : index
    %1 = vector.load %arg2[%c0_1, %c0_2] : memref<48x256xbf16, #tpu.memory_space<vmem>>, vector<48x256xbf16>
    %cst = arith.constant dense<0.000000e+00> : vector<8x256xf32>
    %2 = tpu.matmul %0, %1, %cst {dimension_numbers = #tpu.dot_dimension_numbers<[1], [0], [0], [1], [0, 0, 1, 1], [], []>} : vector<8x48xbf16>, vector<48x256xbf16>, vector<8x256xf32> -> vector<8x256xf32>
    %c0_3 = arith.constant 0 : index
    %c0_4 = arith.constant 0 : index
    %3 = vector.load %arg3[%c0_3, %c0_4] : memref<8x256xf32, #tpu.memory_space<vmem>>, vector<8x256xf32>
    tpu.vector_store %arg3[%c0_3, %c0_4], %2 {strides = array<i32>} : memref<8x256xf32, #tpu.memory_space<vmem>>, vector<8x256xf32>,
    return
  }
  func.func @transform_0(%arg0: i32) -> (i32, i32) {
    %c0_i32 = arith.constant 0 : i32
    %c0_i32_0 = arith.constant 0 : i32
    %c0_i32_1 = arith.constant 0 : i32
    return %c0_i32, %c0_i32_0 : i32, i32
  }
  func.func @transform_1(%arg0: i32) -> (i32, i32) {
    %c0_i32 = arith.constant 0 : i32
    %c0_i32_0 = arith.constant 0 : i32
    return %c0_i32, %arg0 : i32, i32
  }
  func.func @transform_2(%arg0: i32) -> (i32, i32) {
    %c0_i32 = arith.constant 0 : i32
    %c0_i32_0 = arith.constant 0 : i32
    return %c0_i32, %arg0 : i32, i32
  }
}

</mosaic_0001>

<llo_original>
// kernel: condnet_forward.1
$region0: #{condnet_forward.1}
  #allocation0 [shape = 'u32[]', space=smem, size = 0x4, offset = 0x4, fixed_abs, tag = 'smem constant byte address 0x4 - core index']
  #allocation1 [shape = 'u32[144,128]{1,0:T(1,128)}', space=vmem, size = 0x12000, scoped, tag = 'internal scratch']
  %s0 = inlined_call_operand.vmem [shape: bf16[8,48], index: 0, kind: input, shape index: {}]
  %s1 = inlined_call_operand.vmem [shape: bf16[48,512], index: 1, kind: input, shape index: {}]
  %s2 = inlined_call_operand.vmem [shape: f32[8,512], index: 2, kind: output, shape index: {}]
  %s3 = sld [smem:[#allocation0]]
  $region79: #{condnet_forward.1} parent=0
    _
  %s5 = ssub.s32 1, %s3
  %s6 = scalar_select 0, %s5, %s3
  $region1: #{condnet_forward.1} parent=0
    #allocation2 [shape = 'u8[49152]{0}', space=vmem, size = 0xc000, scoped, tag = 'input window, operand 1']
    loop: start=0, step=1, limit=4
    $region2: #{condnet_forward.1} parent=1 // loop_pre_header
      _
    $region3: #{condnet_forward.1} parent=1 // loop_header
      %s8 = sphi 0, %s12
      %p9 = scmp.ge.s32.totalorder %s8, 4
      %s16 = sphi 0, %s16
      %s18 = sphi 0, %s16
      %s19 = sphi 0, %s18
      %s33 = sphi 0, %s19
      %s39 = sphi 0, %s41
      %s42 = sphi 0, %s39
      %s43 = sphi 0, %s42
      %s59 = sphi 0, %s43
      %s65 = sphi 0, %s67
      %s68 = sphi 0, %s65
      %s69 = sphi 0, %s68
      %s85 = sphi 0, %s69
    $region4: #{condnet_forward.1} parent=1 // loop_header_branch
      %11 = sbr.rel (%p9) target = $region8
    $region5: #{condnet_forward.1} parent=1 // loop_body
      %s13 = ssub.s32 %s8, 1
      %s14 = ssub.s32 %s8, 2
      %s15 = sadd.s32 %s8, 1
      %s17 = sadd.s32 %s16, 1
      %p20 = scmp.eq.s32.totalorder %s8, 1
      %p21 = scmp.ne.s32.totalorder %s16, %s18
      %p22 = scmp.eq.s32.totalorder %s8, 0
      %p23 = por %p21, %p22
      %p24 = scmp.ne.s32.totalorder %s16, %s18
      %p25 = scmp.eq.s32.totalorder %s13, 1
      %p26 = por %p24, %p25
      %p27 = scmp.ne.s32.totalorder %s18, %s19
      %p28 = scmp.eq.s32.totalorder %s13, 0
      %p29 = por %p27, %p28
      %p30 = scmp.ne.s32.totalorder %s18, %s19
      %p31 = scmp.eq.s32.totalorder %s14, 1
      %p32 = por %p30, %p31
      %p34 = scmp.ne.s32.totalorder %s19, %s33
      %p35 = scmp.eq.s32.totalorder %s14, 0
      %p36 = por %p34, %p35
      %s37 = ssub.s32 %s8, %s15
      %p38 = scmp.eq.s32.totalorder %s37, 0
      %s40 = sadd.s32 %s39, 1
      %s41 = scalar_select %p38, %s39, %s40
      %p44 = pneg %p38
      %p45 = scmp.eq.s32.totalorder %s8, 1
      %p46 = por %p44, %p45
      %p47 = scmp.ne.s32.totalorder %s39, %s42
      %p48 = scmp.eq.s32.totalorder %s8, 0
      %p49 = por %p47, %p48
      %p50 = scmp.ne.s32.totalorder %s39, %s42
      %p51 = scmp.eq.s32.totalorder %s13, 1
      %p52 = por %p50, %p51
      %p53 = scmp.ne.s32.totalorder %s42, %s43
      %p54 = scmp.eq.s32.totalorder %s13, 0
      %p55 = por %p53, %p54
      %p56 = scmp.ne.s32.totalorder %s42, %s43
      %p57 = scmp.eq.s32.totalorder %s14, 1
      %p58 = por %p56, %p57
      %p60 = scmp.ne.s32.totalorder %s43, %s59
      %p61 = scmp.eq.s32.totalorder %s14, 0
      %p62 = por %p60, %p61
      %s63 = ssub.s32 %s8, %s15
      %p64 = scmp.eq.s32.totalorder %s63, 0
      %s66 = sadd.s32 %s65, 1
      %s67 = scalar_select %p64, %s65, %s66
      %p70 = pneg %p64
      %p71 = scmp.eq.s32.totalorder %s8, 1
      %p72 = por %p70, %p71
      %p73 = scmp.ne.s32.totalorder %s65, %s68
      %p74 = scmp.eq.s32.totalorder %s8, 0
      %p75 = por %p73, %p74
      %p76 = scmp.ne.s32.totalorder %s65, %s68
      %p77 = scmp.eq.s32.totalorder %s13, 1
      %p78 = por %p76, %p77
      %p79 = scmp.ne.s32.totalorder %s68, %s69
      %p80 = scmp.eq.s32.totalorder %s13, 0
      %p81 = por %p79, %p80
      %p82 = scmp.ne.s32.totalorder %s68, %s69
      %p83 = scmp.eq.s32.totalorder %s14, 1
      %p84 = por %p82, %p83
      %p86 = scmp.ne.s32.totalorder %s69, %s85
      %p87 = scmp.eq.s32.totalorder %s14, 0
      %p88 = por %p86, %p87
      %p89 = scmp.le.s32.totalorder 1, %s8
      %p90 = scmp.lt.s32.totalorder %s8, 3
      %p91 = pnand %p89, %p90
      %p92 = pneg %p91
      // Predicated region
      $region9: #{condnet_forward.1} parent=5 // pred_check
        _
      $region10: #{condnet_forward.1} parent=5 // pred_check_branch
        %94 = sbr.rel (%p91) target = $region12
      $region11: #{condnet_forward.1} parent=5 // pred_region
        %s95 = ssub.s32 %s8, 1
        // Predicated region
        $region13: #{condnet_forward.1} parent=11 // pred_check
          %p96 = pneg %p29
        $region14: #{condnet_forward.1} parent=11 // pred_check_branch
          %98 = sbr.rel (%p96) target = $region16
        $region15: #{condnet_forward.1} parent=11 // pred_region
          _
        $region16: #{condnet_forward.1} parent=11 // pred_fallthru
          _
      $region12: #{condnet_forward.1} parent=5 // pred_fallthru
        _
      %p99 = scmp.lt.s32.totalorder %s8, 2
      // Predicated region
      $region17: #{condnet_forward.1} parent=5 // pred_check
        %p100 = pneg %p99
      $region18: #{condnet_forward.1} parent=5 // pred_check_branch
        %102 = sbr.rel (%p100) target = $region20
      $region19: #{condnet_forward.1} parent=5 // pred_region
        // Predicated region
        $region21: #{condnet_forward.1} parent=19 // pred_check
          %p103 = pneg %p49
        $region22: #{condnet_forward.1} parent=19 // pred_check_branch
          %105 = sbr.rel (%p103) target = $region24
        $region23: #{condnet_forward.1} parent=19 // pred_region
          %s106 = sand.u32 %s39, 1
          %s107 = sand.u32 %s39, 1
          %s108 = smul.addr %s107, 48
          %s109 = scalar_lea.vmem [#allocation2], %s108
          %s110 = smul.u32 2, %s8
          %s111 = smul.addr %s110, 4
          %s112 = scalar_lea.vmem %s1, %s111
          // Predicated region
          $region25: #{condnet_forward.1} parent=23 // pred_check
            _
          $region26: #{condnet_forward.1} parent=23 // pred_check_branch
            %114 = sbr.rel (0) target = $region28
          $region27: #{condnet_forward.1} parent=23 // pred_region
            // Predicated region
            $region29: #{condnet_forward.1} parent=27 // pred_check
              _
            $region30: #{condnet_forward.1} parent=27 // pred_check_branch
              %116 = sbr.rel (0) target = $region32
            $region31: #{condnet_forward.1} parent=27 // pred_region
              // Predicated region
              $region44: #{condnet_forward.1} parent=31 // pred_check
                _
              $region45: #{condnet_forward.1} parent=31 // pred_check_branch
                %141 = sbr.rel (0) target = $region47
              $region46: #{condnet_forward.1} parent=31 // pred_region
                loop: start=0, step=1, limit=1
                $region48: #{condnet_forward.1} parent=46 // loop_pre_header
                  _
                $region49: #{condnet_forward.1} parent=46 // loop_header
                  %s143 = sphi 0, %s147
                  %p144 = scmp.ge.s32.totalorder %s143, 1
                  %s148 = sphi %s112, %s112
                  %s149 = sphi %s109, %s109
                $region50: #{condnet_forward.1} parent=46 // loop_header_branch
                  %146 = sbr.rel (%p144) target = $region54
                $region51: #{condnet_forward.1} parent=46 // loop_body
                  %v150 = vld [vmem:[%s148] sm:$0xff]
                  %151 = vst [vmem:[%s149] sm:$0xff] %v150
                  %v152 = vld [vmem:[%s148 + $0x10] sm:$0xff]
                  %153 = vst [vmem:[%s149 + $0x8] sm:$0xff] %v152
                  %v154 = vld [vmem:[%s148 + $0x20] sm:$0xff]
                  %155 = vst [vmem:[%s149 + $0x10] sm:$0xff] %v154
                  %v156 = vld [vmem:[%s148 + $0x30] sm:$0xff]
                  %157 = vst [vmem:[%s149 + $0x18] sm:$0xff] %v156
                  %v158 = vld [vmem:[%s148 + $0x40] sm:$0xff]
                  %159 = vst [vmem:[%s149 + $0x20] sm:$0xff] %v158
                  %v160 = vld [vmem:[%s148 + $0x50] sm:$0xff]
                  %161 = vst [vmem:[%s149 + $0x28] sm:$0xff] %v160
                $region52: #{condnet_forward.1} parent=46 // loop_footer
                  %s147 = sadd.s32 1, %s143
                $region53: #{condnet_forward.1} parent=46 // loop_footer_branch
                  %142 = sbr.rel target = $region49
                $region54: #{condnet_forward.1} parent=46 // loop_exit
                  _
              $region47: #{condnet_forward.1} parent=31 // pred_fallthru
                _
              // Predicated region
              $region55: #{condnet_forward.1} parent=31 // pred_check
                _
              $region56: #{condnet_forward.1} parent=31 // pred_check_branch
                %163 = sbr.rel target = $region58
              $region57: #{condnet_forward.1} parent=31 // pred_region
                _
              $region58: #{condnet_forward.1} parent=31 // pred_fallthru
                _
            $region32: #{condnet_forward.1} parent=27 // pred_fallthru
              _
            // Predicated region
            $region33: #{condnet_forward.1} parent=27 // pred_check
              _
            $region34: #{condnet_forward.1} parent=27 // pred_check_branch
              %118 = sbr.rel target = $region36
            $region35: #{condnet_forward.1} parent=27 // pred_region
              loop: start=0, step=1, limit=1
              $region37: #{condnet_forward.1} parent=35 // loop_pre_header
                _
              $region38: #{condnet_forward.1} parent=35 // loop_header
                %s121 = sphi 0, %s125
                %p122 = scmp.ge.s32.totalorder %s121, 1
                %s126 = sphi %s112, %s112
                %s127 = sphi %s109, %s109
              $region39: #{condnet_forward.1} parent=35 // loop_header_branch
                %124 = sbr.rel (%p122) target = $region43
              $region40: #{condnet_forward.1} parent=35 // loop_body
                %v128 = vld [vmem:[%s126] sm:$0xff]
                %129 = vst [vmem:[%s127] sm:$0xff] %v128
                %v130 = vld [vmem:[%s126 + $0x10] sm:$0xff]
                %131 = vst [vmem:[%s127 + $0x8] sm:$0xff] %v130
                %v132 = vld [vmem:[%s126 + $0x20] sm:$0xff]
                %133 = vst [vmem:[%s127 + $0x10] sm:$0xff] %v132
                %v134 = vld [vmem:[%s126 + $0x30] sm:$0xff]
                %135 = vst [vmem:[%s127 + $0x18] sm:$0xff] %v134
                %v136 = vld [vmem:[%s126 + $0x40] sm:$0xff]
                %137 = vst [vmem:[%s127 + $0x20] sm:$0xff] %v136
                %v138 = vld [vmem:[%s126 + $0x50] sm:$0xff]
                %139 = vst [vmem:[%s127 + $0x28] sm:$0xff] %v138
              $region41: #{condnet_forward.1} parent=35 // loop_footer
                %s125 = sadd.s32 1, %s121
              $region42: #{condnet_forward.1} parent=35 // loop_footer_branch
                %120 = sbr.rel target = $region38
              $region43: #{condnet_forward.1} parent=35 // loop_exit
                _
            $region36: #{condnet_forward.1} parent=27 // pred_fallthru
              _
          $region28: #{condnet_forward.1} parent=23 // pred_fallthru
            _
          %164 = vnop
        $region24: #{condnet_forward.1} parent=19 // pred_fallthru
          _
      $region20: #{condnet_forward.1} parent=5 // pred_fallthru
        _
      %p165 = scmp.le.s32.totalorder 1, %s8
      %p166 = scmp.lt.s32.totalorder %s8, 3
      %p167 = pnand %p165, %p166
      %p168 = pneg %p167
      // Predicated region
      $region59: #{condnet_forward.1} parent=5 // pred_check
        _
      $region60: #{condnet_forward.1} parent=5 // pred_check_branch
        %170 = sbr.rel (%p167) target = $region62
      $region61: #{condnet_forward.1} parent=5 // pred_region
        %s171 = ssub.s32 %s8, 1
        %s172 = sand.u32 %s42, 1
        %s173 = sand.u32 %s42, 1
        %s174 = smul.addr %s173, 48
        %s175 = scalar_lea.vmem [#allocation2], %s174
        // Predicated region
        $region63: #{condnet_forward.1} parent=61 // pred_check
          %p176 = pneg %p55
        $region64: #{condnet_forward.1} parent=61 // pred_check_branch
          %178 = sbr.rel (%p176) target = $region66
        $region65: #{condnet_forward.1} parent=61 // pred_region
          _
        $region66: #{condnet_forward.1} parent=61 // pred_fallthru
          _
        %p179 = pneg %p29
        %p180 = pneg %p26
        %s181 = sand.u32 %s42, 1
        %s182 = sand.u32 %s42, 1
        %s183 = smul.addr %s182, 48
        %s184 = scalar_lea.vmem [#allocation2], %s183
        %p185 = pneg %p55
        %p186 = pneg %p52
        %p187 = pneg %p81
        %p188 = pneg %p78
        %s189 = smul.u32 2, %s13
        %p190 = scmp.lt.s32.totalorder %s189, 3
        %s191 = scalar_select %p190, %s189, 3
        %s192 = smul.addr %s191, 8
        %s193 = scalar_lea.vmem %s2, %s192
        %s194 = smul.u32 2, %s13
        %s195 = smul.u32 2, %s13
        %p196 = scmp.lt.s32.totalorder %s195, 3
        %s197 = scalar_select %p196, %s195, 3
        %s198 = smul.addr %s197, 8
        %s199 = scalar_lea.vmem %s2, %s198
        %s200 = smul.u32 2, %s13
        %v202 = vld [vmem:[%s0] sm:$0xf]
        %v203 = vld [vmem:[%s175] sm:$0xff]
        %v204 = vld [vmem:[%s175 + $0x8] sm:$0xff]
        %v205 = vld [vmem:[%s175 + $0x10] sm:$0xff]
        %v206 = vld [vmem:[%s175 + $0x18] sm:$0xff]
        %v207 = vld [vmem:[%s175 + $0x20] sm:$0xff]
        %v208 = vld [vmem:[%s175 + $0x28] sm:$0xff]
        %v215 = vunpack.c.l.b16 %v203
        %v216 = vunpack.c.h.b16 %v203
        %v217 = vunpack.c.l.b16 %v204
        %v218 = vunpack.c.h.b16 %v204
        %v219 = vunpack.c.l.b16 %v205
        %v220 = vunpack.c.h.b16 %v205
        %v221 = vunpack.c.l.b16 %v206
        %v222 = vunpack.c.h.b16 %v206
        %v223 = vunpack.c.l.b16 %v207
        %v224 = vunpack.c.h.b16 %v207
        %v225 = vunpack.c.l.b16 %v208
        %v226 = vunpack.c.h.b16 %v208
        %v227 = vpack.c.b16 %v217, %v215
        %v228 = vpack.c.b16 %v218, %v216
        %v229 = vpack.c.b16 %v221, %v219
        %v230 = vpack.c.b16 %v222, %v220
        %v231 = vpack.c.b16 %v225, %v223
        %v232 = vpack.c.b16 %v226, %v224
        %vm239 = vcmask 392192
        %v241 = vsel %vm239, %v202, 0
        %243 = vmatprep.subr.bf16.mxu0 %v228
        %244 = vmatpush1.bf16.msra.mxu0 %v227
        %245 = vmatprep.subr.bf16.mxu0 %v230
        %246 = vmatpush1.bf16.msra.mxu0 %v229
        %247 = vmatprep.subr.bf16.mxu0 %v232
        %248 = vmatpush1.bf16.msra.mxu0 %v231
        %249 = vmatprep.subr.bf16.mxu0 0
        %250 = vmatpush1.bf16.msra.mxu0 0
        %251 = vmatprep.subr.bf16.mxu0 0
        %252 = vmatpush1.bf16.msra.mxu0 0
        %253 = vmatprep.subr.bf16.mxu0 0
        %254 = vmatpush1.bf16.msra.mxu0 0
        %255 = vmatprep.subr.bf16.mxu0 0
        %256 = vmatpush1.bf16.msra.mxu0 0
        %257 = vmatprep.subr.bf16.mxu0 0
        %258 = vmatpush1.bf16.msra.mxu0 0
        %259 = vmatprep.subr.bf16.mxu0 0
        %260 = vmatpush1.bf16.msra.mxu0 0
        %261 = vmatprep.subr.bf16.mxu0 0
        %262 = vmatpush1.bf16.msra.mxu0 0
        %263 = vmatprep.subr.bf16.mxu0 0
        %264 = vmatpush1.bf16.msra.mxu0 0
        %265 = vmatprep.subr.bf16.mxu0 0
        %266 = vmatpush1.bf16.msra.mxu0 0
        %267 = vmatprep.subr.bf16.mxu0 0
        %268 = vmatpush1.bf16.msra.mxu0 0
        %269 = vmatprep.subr.bf16.mxu0 0
        %270 = vmatpush1.bf16.msra.mxu0 0
        %271 = vmatprep.subr.bf16.mxu0 0
        %272 = vmatpush1.bf16.msra.mxu0 0
        %273 = vmatprep.subr.bf16.mxu0 0
        %274 = vmatpush1.bf16.msra.mxu0 0
        %275 = vmatprep.mubr.bf16.mxu0 0
        %276 = vmatmul.mubr.bf16.gmra.mrb[0].mxu0 %v241
        %v277 = vpop.f32.mrb[0].mxu0
        %v278 = vadd.f32 0.0, %v277
        %v279 = vpop.f32.mrb[0].mxu0
        %v280 = vadd.f32 0.0, %v279
        %v281 = vpop.f32.mrb[0].mxu0
        %v282 = vpop.f32.mrb[0].mxu0
        %283 = vdwg.mxu0
        %284 = vst [vmem:[%s199] sm:$0xff] %v278
        %285 = vst [vmem:[%s199 + $0x8] sm:$0xff] %v280
        %s286 = smul.u32 2, %s13
        %p287 = scmp.lt.s32.totalorder %s286, 3
        %s288 = scalar_select %p287, %s286, 3
        %s289 = smul.addr %s288, 8
        %s290 = scalar_lea.vmem %s2, %s289
        // Predicated region
        $region67: #{condnet_forward.1} parent=61 // pred_check
          %p291 = pneg %p78
        $region68: #{condnet_forward.1} parent=61 // pred_check_branch
          %293 = sbr.rel (%p291) target = $region70
        $region69: #{condnet_forward.1} parent=61 // pred_region
          %s294 = smul.u32 2, %s13
        $region70: #{condnet_forward.1} parent=61 // pred_fallthru
          _
      $region62: #{condnet_forward.1} parent=5 // pred_fallthru
        _
      %p295 = scmp.le.s32.totalorder 2, %s8
      // Predicated region
      $region71: #{condnet_forward.1} parent=5 // pred_check
        %p296 = pneg %p295
      $region72: #{condnet_forward.1} parent=5 // pred_check_branch
        %298 = sbr.rel (%p296) target = $region74
      $region73: #{condnet_forward.1} parent=5 // pred_region
        %s299 = ssub.s32 %s8, 2
        // Predicated region
        $region75: #{condnet_forward.1} parent=73 // pred_check
          %p300 = pneg %p84
        $region76: #{condnet_forward.1} parent=73 // pred_check_branch
          %302 = sbr.rel (%p300) target = $region78
        $region77: #{condnet_forward.1} parent=73 // pred_region
          %s303 = smul.u32 2, %s14
          %p304 = scmp.lt.s32.totalorder %s303, 3
          %s305 = scalar_select %p304, %s303, 3
          %s306 = smul.addr %s305, 8
          %s307 = scalar_lea.vmem %s2, %s306
        $region78: #{condnet_forward.1} parent=73 // pred_fallthru
          _
      $region74: #{condnet_forward.1} parent=5 // pred_fallthru
        _
    $region6: #{condnet_forward.1} parent=1 // loop_footer
      %s12 = sadd.s32 1, %s8
    $region7: #{condnet_forward.1} parent=1 // loop_footer_branch
      %7 = sbr.rel target = $region3
    $region8: #{condnet_forward.1} parent=1 // loop_exit
      _

</llo_original>
